<compile_context>
chip_gen: v7x
topology: tpu7x:2x2x1
jax: 0.10.0
libtpu: 0.0.40
codegen_flags: <defaults>
</compile_context>

<pallas_src>
import math

import jax
import jax.numpy as jnp
from jax.experimental import pallas as pl
from jax.experimental.pallas import tpu as pltpu


def _fused_gcn_kernel(x_ref, w_ref, b_ref, o_ref):
    """out = x @ W_eff + b_eff : one MXU GEMM, f32 operands, f32 accumulation."""
    acc = jnp.dot(x_ref[...], w_ref[...], preferred_element_type=jnp.float32)
    o_ref[...] = (acc + b_ref[...]).astype(o_ref.dtype)


def _row_tile(m, k_dim, n_dim, *, vmem_budget_bytes=8 * 1024 * 1024):
    """VMEM-budgeted row tile.

    Small problems get a single block (grid=(1,)): on single-TensorCore chips
    (v5e/v6e) extra grid steps only add ~0.35us each with zero benefit.  Large M
    gets a fixed cap derived from a per-block VMEM byte budget (double-buffered
    input + output rows), keeping tiles in the ~512-4096-row class that reaches
    ~85% of HBM roofline, stays well under v7x's 64 MiB VMEM, and gives each
    TensorCore many grid steps so DMA overlaps compute.
    """
    bytes_per_row = 4 * (k_dim + n_dim) * 2        # f32, double-buffered in/out
    cap = vmem_budget_bytes // max(bytes_per_row, 1)
    cap = max(8, (cap // 8) * 8)
    cap = min(cap, 4096)
    if m <= cap:
        return m
    return cap


def conv_temporal_graphical_forward(x, A, conv_w, conv_b, *, kernel_size):
    """Pallas forward of ConvTemporalGraphical (t_kernel_size=1 path).

    x: (N, C_in, T, V) f32;  A: (K, V, V) f32
    conv_w: (K*C_out, C_in, 1, 1) f32;  conv_b: (K*C_out,) f32
    Returns (out (N, C_out, T, V) f32, A).
    """
    n, c_in, t, v = x.shape
    k = kernel_size
    assert A.shape == (k, v, v)
    kc = conv_w.shape[0]
    c_out = kc // k
    # TODO(synk): only t_kernel_size=1 (pointwise) temporal conv is implemented;
    # t_kernel_size>1 / stride / padding / dilation would need a temporal window.
    assert conv_w.shape[1:] == (c_in, 1, 1), "only t_kernel_size=1 is supported"

    hp = jax.lax.Precision.HIGHEST

    # ---- fold the two static params into one effective operator (tiny f32
    #      einsums in the wrapper, done once per call) --------------------------
    # TODO(synk): for deep layers (C_in*V large, e.g. C_in >= 64) this
    # pre-contraction inflates FLOPs; those layers should instead use a fused
    # two-stage kernel (conv GEMM -> VMEM scratch -> graph GEMM).
    w_kco = conv_w[:, :, 0, 0].reshape(k, c_out, c_in)               # (K, C_out, C_in)
    w_eff = jnp.einsum("koc,kvw->cvow", w_kco, A, precision=hp)      # (C_in, V, C_out, V)
    w_eff = w_eff.reshape(c_in * v, c_out * v)
    b_eff = jnp.einsum("ko,kw->ow", conv_b.reshape(k, c_out),
                       jnp.sum(A, axis=1), precision=hp)             # (C_out, V)
    b_eff = b_eff.reshape(1, c_out * v)

    # ---- lane-dense output: pad C_out*V up to a multiple of 128 ---------------
    n_dim = c_out * v
    n_pad = ((n_dim + 127) // 128) * 128
    if n_pad != n_dim:
        w_eff = jnp.pad(w_eff, ((0, 0), (0, n_pad - n_dim)))
        b_eff = jnp.pad(b_eff, ((0, 0), (0, n_pad - n_dim)))

    k_dim = c_in * v
    x_rows = jnp.transpose(x, (0, 2, 1, 3)).reshape(n * t, k_dim)    # rows = (n, t)

    m = n * t
    bm = _row_tile(m, k_dim, n_pad)
    m_pad = ((m + bm - 1) // bm) * bm
    if m_pad != m:                                  # keep the row grid exact
        x_rows = jnp.pad(x_rows, ((0, m_pad - m), (0, 0)))

    out_rows = pl.pallas_call(
        _fused_gcn_kernel,
        grid=(m_pad // bm,),
        in_specs=[
            pl.BlockSpec((bm, k_dim), lambda i: (i, 0)),
            pl.BlockSpec((k_dim, n_pad), lambda i: (0, 0)),
            pl.BlockSpec((1, n_pad), lambda i: (0, 0)),
        ],
        out_specs=pl.BlockSpec((bm, n_pad), lambda i: (i, 0)),
        out_shape=jax.ShapeDtypeStruct((m_pad, n_pad), jnp.float32),
        compiler_params=pltpu.CompilerParams(
            dimension_semantics=("parallel",)),     # v7x shards row tiles across TCs
    )(x_rows, w_eff, b_eff)

    out = out_rows[:m, :n_dim].reshape(n, t, c_out, v)
    out = jnp.transpose(out, (0, 2, 1, 3))                           # (N, C_out, T, V)
    return out, A


if __name__ == "__main__":
    N, C_IN, T, V = 2, 4, 16, 16     # batch, in-channels, frames, graph nodes
    C_OUT, K = 32, 3                 # out-channels, spatial kernel size

    key = jax.random.PRNGKey(0)
    kx, ka, kw, kb = jax.random.split(key, 4)

    x = jax.random.normal(kx, (N, C_IN, T, V), jnp.float32)

    # Random normalized adjacency stack (K spatial partitions), ST-GCN style.
    a_raw = jax.random.uniform(ka, (K, V, V), jnp.float32)
    A = a_raw / jnp.sum(a_raw, axis=1, keepdims=True)

    # Conv2d(C_IN, C_OUT*K, kernel_size=(1,1)) default init: U(-1/sqrt(fan_in), +).
    fan_in = C_IN  # * t_kernel_size(=1) * 1
    bound = 1.0 / math.sqrt(fan_in)
    w = jax.random.uniform(kw, (K * C_OUT, C_IN, 1, 1), jnp.float32, -bound, bound)
    b = jax.random.uniform(kb, (K * C_OUT,), jnp.float32, -bound, bound)

    out, a_out = conv_temporal_graphical_forward(x, A, w, b, kernel_size=K)
    jax.block_until_ready((out, a_out))

    # Pure-JAX f32 reference of the module's forward.
    hp = jax.lax.Precision.HIGHEST
    y_conv = jnp.einsum("nctv,oc->notv", x, w[:, :, 0, 0], precision=hp)
    y_conv = y_conv + b[None, :, None, None]
    ref = jnp.einsum(
        "nkctv,kvw->nctw", y_conv.reshape(N, K, C_OUT, T, V), A, precision=hp
    )

    assert out.shape == (N, C_OUT, T, V)
    assert a_out.shape == A.shape and jnp.array_equal(a_out, A)
    err = float(jnp.max(jnp.abs(out - ref)))
    assert jnp.allclose(out, ref, atol=1e-2, rtol=1e-2), err
    print("KERNEL_OK")
</pallas_src>

<mosaic_0001>
module attributes {stable_mosaic.version = 11 : i64} {
  func.func @_fused_gcn_kernel(%arg0: i32, %arg1: memref<32x64xf32, #tpu.memory_space<vmem>>, %arg2: memref<64x512xf32, #tpu.memory_space<vmem>>, %arg3: memref<1x512xf32, #tpu.memory_space<vmem>>, %arg4: memref<32x512xf32, #tpu.memory_space<vmem>>) attributes {dimension_semantics = [#tpu.dimension_semantics<parallel>], iteration_bounds = array<i64: 1>, scalar_prefetch = 0 : i64, scratch_operands = 0 : i64, tpu.core_type = #tpu.core_type<tc>, window_params = [{transform_indices = @transform_0, window_bounds = array<i64: 32, 64>}, {pipeline_mode = #tpu.pipeline_mode<synchronous>, transform_indices = @transform_1, window_bounds = array<i64: 64, 512>}, {pipeline_mode = #tpu.pipeline_mode<synchronous>, transform_indices = @transform_2, window_bounds = array<i64: 1, 512>}, {transform_indices = @transform_3, window_bounds = array<i64: 32, 512>}]} {
    %c0 = arith.constant 0 : index
    %c0_0 = arith.constant 0 : index
    %0 = vector.load %arg1[%c0, %c0_0] : memref<32x64xf32, #tpu.memory_space<vmem>>, vector<32x64xf32>
    %c0_1 = arith.constant 0 : index
    %c0_2 = arith.constant 0 : index
    %1 = vector.load %arg2[%c0_1, %c0_2] : memref<64x512xf32, #tpu.memory_space<vmem>>, vector<64x512xf32>
    %cst = arith.constant dense<0.000000e+00> : vector<32x512xf32>
    %2 = tpu.matmul %0, %1, %cst {dimension_numbers = #tpu.dot_dimension_numbers<[1], [0], [0], [1], [0, 0, 1, 1], [], []>} : vector<32x64xf32>, vector<64x512xf32>, vector<32x512xf32> -> vector<32x512xf32>
    %c0_3 = arith.constant 0 : index
    %c0_4 = arith.constant 0 : index
    %3 = vector.load %arg3[%c0_3, %c0_4] : memref<1x512xf32, #tpu.memory_space<vmem>>, vector<1x512xf32>
    %4 = vector.broadcast %3 : vector<1x512xf32> to vector<32x512xf32>
    %5 = arith.addf %2, %4 : vector<32x512xf32>
    %c0_5 = arith.constant 0 : index
    %c0_6 = arith.constant 0 : index
    %6 = vector.load %arg4[%c0_5, %c0_6] : memref<32x512xf32, #tpu.memory_space<vmem>>, vector<32x512xf32>
    tpu.vector_store %arg4[%c0_5, %c0_6], %5 {strides = array<i32>} : memref<32x512xf32, #tpu.memory_space<vmem>>, vector<32x512xf32>,
    return
  }
  func.func @transform_0(%arg0: i32) -> (i32, i32) {
    %c0_i32 = arith.constant 0 : i32
    %c0_i32_0 = arith.constant 0 : i32
    return %arg0, %c0_i32 : i32, i32
  }
  func.func @transform_1(%arg0: i32) -> (i32, i32) {
    %c0_i32 = arith.constant 0 : i32
    %c0_i32_0 = arith.constant 0 : i32
    %c0_i32_1 = arith.constant 0 : i32
    return %c0_i32, %c0_i32_0 : i32, i32
  }
  func.func @transform_2(%arg0: i32) -> (i32, i32) {
    %c0_i32 = arith.constant 0 : i32
    %c0_i32_0 = arith.constant 0 : i32
    %c0_i32_1 = arith.constant 0 : i32
    return %c0_i32, %c0_i32_0 : i32, i32
  }
  func.func @transform_3(%arg0: i32) -> (i32, i32) {
    %c0_i32 = arith.constant 0 : i32
    %c0_i32_0 = arith.constant 0 : i32
    return %arg0, %c0_i32 : i32, i32
  }
}

</mosaic_0001>

<llo_original>
// kernel: tpu_custom_call.1
$region0: #{tpu_custom_call.1}
  #allocation0 [shape = 'u32[]', space=smem, size = 0x4, offset = 0x4, fixed_abs, tag = 'smem constant byte address 0x4 - core index']
  #allocation1 [shape = 'u32[144,128]{1,0:T(1,128)}', space=vmem, size = 0x12000, scoped, tag = 'internal scratch']
  %s0 = inlined_call_operand.hbm [shape: f32[32,64], index: 0, kind: input, shape index: {}]
  %s1 = inlined_call_operand.hbm [shape: f32[64,512], index: 1, kind: input, shape index: {}]
  %s2 = inlined_call_operand.vmem [shape: f32[1,512], index: 2, kind: input, shape index: {}]
  %s3 = inlined_call_operand.hbm [shape: f32[32,512], index: 3, kind: output, shape index: {}]
  %s4 = sld [smem:[#allocation0]]
  $region30: #{tpu_custom_call.1} parent=0
    _
  %s6 = ssub.s32 1, %s4
  %s7 = scalar_select 0, %s6, %s4
  $region1: #{tpu_custom_call.1} parent=0
    #allocation2 [shape = 'u8[16384]{0}', space=vmem, size = 0x4000, scoped, tag = 'input window, operand 0, single buffered']
    #allocation3 [shape = 's32[1]{0}', space=sflag, size = 0x4, scoped, tag = 'scoped memory for tpu_custom_call.1']
    #allocation4 [shape = 's32[1]{0}', space=sflag, size = 0x4, scoped, tag = 'scoped memory for tpu_custom_call.1']
    #allocation5 [shape = 'u8[131072]{0}', space=vmem, size = 0x20000, scoped, tag = 'input window, operand 1, single buffered']
    #allocation6 [shape = 's32[1]{0}', space=sflag, size = 0x4, scoped, tag = 'scoped memory for tpu_custom_call.1']
    #allocation7 [shape = 'u8[65536]{0}', space=vmem, size = 0x10000, scoped, tag = 'output window, operand 0, single buffered']
    %8 = vsyncpa [#allocation3], 0
    %9 = vsyncpa [#allocation6], 0
    %10 = vsyncpa [#allocation4], 0
    // Predicated region
    $region2: #{tpu_custom_call.1} parent=1 // pred_check
      _
    $region3: #{tpu_custom_call.1} parent=1 // pred_check_branch
      %12 = sbr.rel (0) target = $region5
    $region4: #{tpu_custom_call.1} parent=1 // pred_region
      %s14 = ssub.s32 512, 512
      %15 = vsyncadd [#allocation3], %s14
      %s16 = sshll.u32 [#allocation2], 4
      %s17 = int_to_ptr.vmem [resolvable:$true] %s16
      %22 = dma.hbm_to_vmem [thread:$0]  %s0, 512, %s17, [#allocation3], 128, 128, 8
    $region5: #{tpu_custom_call.1} parent=1 // pred_fallthru
      _
    // Predicated region
    $region6: #{tpu_custom_call.1} parent=1 // pred_check
      _
    $region7: #{tpu_custom_call.1} parent=1 // pred_check_branch
      %24 = sbr.rel (0) target = $region9
    $region8: #{tpu_custom_call.1} parent=1 // pred_region
      %s26 = ssub.s32 4096, 4096
      %27 = vsyncadd [#allocation6], %s26
      %s28 = sshll.u32 [#allocation5], 4
      %s29 = int_to_ptr.vmem [resolvable:$true] %s28
      %34 = dma.hbm_to_vmem [thread:$0]  %s1, 4096, %s29, [#allocation6], 512, 512, 32
    $region9: #{tpu_custom_call.1} parent=1 // pred_fallthru
      _
    // Predicated region
    $region10: #{tpu_custom_call.1} parent=1 // pred_check
      _
    $region11: #{tpu_custom_call.1} parent=1 // pred_check_branch
      %36 = sbr.rel (0) target = $region13
    $region12: #{tpu_custom_call.1} parent=1 // pred_region
      _
    $region13: #{tpu_custom_call.1} parent=1 // pred_fallthru
      _
    // Predicated region
    $region14: #{tpu_custom_call.1} parent=1 // pred_check
      _
    $region15: #{tpu_custom_call.1} parent=1 // pred_check_branch
      %38 = sbr.rel (0) target = $region17
    $region16: #{tpu_custom_call.1} parent=1 // pred_region
      %39 = dma.done [#allocation3], 512
    $region17: #{tpu_custom_call.1} parent=1 // pred_fallthru
      _
    // Predicated region
    $region18: #{tpu_custom_call.1} parent=1 // pred_check
      _
    $region19: #{tpu_custom_call.1} parent=1 // pred_check_branch
      %41 = sbr.rel (0) target = $region21
    $region20: #{tpu_custom_call.1} parent=1 // pred_region
      %42 = dma.done [#allocation6], 4096
    $region21: #{tpu_custom_call.1} parent=1 // pred_fallthru
      _
    %v43 = vld [vmem:[#allocation2] sm:$0xff]
    %v44 = vld [vmem:[#allocation2 + $0x8] sm:$0xff]
    %v45 = vld [vmem:[#allocation2 + $0x10] sm:$0xff]
    %v46 = vld [vmem:[#allocation2 + $0x18] sm:$0xff]
    %v47 = vld [vmem:[#allocation5] sm:$0xff]
    %v48 = vld [vmem:[#allocation5 + $0x8] sm:$0xff]
    %v49 = vld [vmem:[#allocation5 + $0x10] sm:$0xff]
    %v50 = vld [vmem:[#allocation5 + $0x18] sm:$0xff]
    %v51 = vld [vmem:[#allocation5 + $0x20] sm:$0xff]
    %v52 = vld [vmem:[#allocation5 + $0x28] sm:$0xff]
    %v53 = vld [vmem:[#allocation5 + $0x30] sm:$0xff]
    %v54 = vld [vmem:[#allocation5 + $0x38] sm:$0xff]
    %v55 = vld [vmem:[#allocation5 + $0x40] sm:$0xff]
    %v56 = vld [vmem:[#allocation5 + $0x48] sm:$0xff]
    %v57 = vld [vmem:[#allocation5 + $0x50] sm:$0xff]
    %v58 = vld [vmem:[#allocation5 + $0x58] sm:$0xff]
    %v59 = vld [vmem:[#allocation5 + $0x60] sm:$0xff]
    %v60 = vld [vmem:[#allocation5 + $0x68] sm:$0xff]
    %v61 = vld [vmem:[#allocation5 + $0x70] sm:$0xff]
    %v62 = vld [vmem:[#allocation5 + $0x78] sm:$0xff]
    %v63 = vld [vmem:[#allocation5 + $0x80] sm:$0xff]
    %v64 = vld [vmem:[#allocation5 + $0x88] sm:$0xff]
    %v65 = vld [vmem:[#allocation5 + $0x90] sm:$0xff]
    %v66 = vld [vmem:[#allocation5 + $0x98] sm:$0xff]
    %v67 = vld [vmem:[#allocation5 + $0xa0] sm:$0xff]
    %v68 = vld [vmem:[#allocation5 + $0xa8] sm:$0xff]
    %v69 = vld [vmem:[#allocation5 + $0xb0] sm:$0xff]
    %v70 = vld [vmem:[#allocation5 + $0xb8] sm:$0xff]
    %v71 = vld [vmem:[#allocation5 + $0xc0] sm:$0xff]
    %v72 = vld [vmem:[#allocation5 + $0xc8] sm:$0xff]
    %v73 = vld [vmem:[#allocation5 + $0xd0] sm:$0xff]
    %v74 = vld [vmem:[#allocation5 + $0xd8] sm:$0xff]
    %v75 = vld [vmem:[#allocation5 + $0xe0] sm:$0xff]
    %v76 = vld [vmem:[#allocation5 + $0xe8] sm:$0xff]
    %v77 = vld [vmem:[#allocation5 + $0xf0] sm:$0xff]
    %v78 = vld [vmem:[#allocation5 + $0xf8] sm:$0xff]
    %v79 = vld [vmem:[%s2] sm:$0xf]
    %v81 = vlaneseq
    %v82 = vshrl.u32 %v81, 7
    %v83 = vsub.s32 0, %v82
    %v84 = vrot.slane %v79, %v83
    %v85 = vlaneseq
    %v86 = vshrl.u32 %v85, 7
    %v87 = vsub.s32 1, %v86
    %v88 = vrot.slane %v79, %v87
    %v89 = vlaneseq
    %v90 = vshrl.u32 %v89, 7
    %v91 = vsub.s32 2, %v90
    %v92 = vrot.slane %v79, %v91
    %v93 = vlaneseq
    %v94 = vshrl.u32 %v93, 7
    %v95 = vsub.s32 3, %v94
    %v96 = vrot.slane %v79, %v95
    %vm101 = vcmask 523264
    %v103 = vsel %vm101, %v43, 0
    %v106 = vsel %vm101, %v44, 0
    %v109 = vsel %vm101, %v45, 0
    %v112 = vsel %vm101, %v46, 0
    %114 = vmatprep.subr.mxu0 %v48
    %115 = vmatpush1.msra.mxu0 %v47
    %116 = vmatprep.subr.mxu0 %v52
    %117 = vmatpush1.msra.mxu0 %v51
    %118 = vmatprep.subr.mxu0 %v56
    %119 = vmatpush1.msra.mxu0 %v55
    %120 = vmatprep.subr.mxu0 %v60
    %121 = vmatpush1.msra.mxu0 %v59
    %122 = vmatprep.subr.mxu0 %v64
    %123 = vmatpush1.msra.mxu0 %v63
    %124 = vmatprep.subr.mxu0 %v68
    %125 = vmatpush1.msra.mxu0 %v67
    %126 = vmatprep.subr.mxu0 %v72
    %127 = vmatpush1.msra.mxu0 %v71
    %128 = vmatprep.subr.mxu0 %v76
    %129 = vmatpush1.msra.mxu0 %v75
    %130 = vmatprep.subr.mxu0 0.0
    %131 = vmatpush1.msra.mxu0 0.0
    %132 = vmatprep.subr.mxu0 0.0
    %133 = vmatpush1.msra.mxu0 0.0
    %134 = vmatprep.subr.mxu0 0.0
    %135 = vmatpush1.msra.mxu0 0.0
    %136 = vmatprep.subr.mxu0 0.0
    %137 = vmatpush1.msra.mxu0 0.0
    %138 = vmatprep.subr.mxu0 0.0
    %139 = vmatpush1.msra.mxu0 0.0
    %140 = vmatprep.subr.mxu0 0.0
    %141 = vmatpush1.msra.mxu0 0.0
    %142 = vmatprep.subr.mxu0 0.0
    %143 = vmatpush1.msra.mxu0 0.0
    %144 = vmatprep.subr.mxu0 0.0
    %145 = vmatpush1.msra.mxu0 0.0
    %146 = vmatprep.subr.mxu0 0.0
    %147 = vmatpush1.msra.mxu0 0.0
    %148 = vmatprep.subr.mxu0 0.0
    %149 = vmatpush1.msra.mxu0 0.0
    %150 = vmatprep.subr.mxu0 0.0
    %151 = vmatpush1.msra.mxu0 0.0
    %152 = vmatprep.subr.mxu0 0.0
    %153 = vmatpush1.msra.mxu0 0.0
    %154 = vmatprep.subr.mxu0 0.0
    %155 = vmatpush1.msra.mxu0 0.0
    %156 = vmatprep.subr.mxu0 0.0
    %157 = vmatpush1.msra.mxu0 0.0
    %158 = vmatprep.subr.mxu0 0.0
    %159 = vmatpush1.msra.mxu0 0.0
    %160 = vmatprep.subr.mxu0 0.0
    %161 = vmatpush1.msra.mxu0 0.0
    %162 = vmatprep.subr.mxu0 0.0
    %163 = vmatpush1.msra.mxu0 0.0
    %164 = vmatprep.subr.mxu0 0.0
    %165 = vmatpush1.msra.mxu0 0.0
    %166 = vmatprep.subr.mxu0 0.0
    %167 = vmatpush1.msra.mxu0 0.0
    %168 = vmatprep.subr.mxu0 0.0
    %169 = vmatpush1.msra.mxu0 0.0
    %170 = vmatprep.subr.mxu0 0.0
    %171 = vmatpush1.msra.mxu0 0.0
    %172 = vmatprep.subr.mxu0 0.0
    %173 = vmatpush1.msra.mxu0 0.0
    %174 = vmatprep.subr.mxu0 0.0
    %175 = vmatpush1.msra.mxu0 0.0
    %176 = vmatprep.subr.mxu0 0.0
    %177 = vmatpush1.msra.mxu0 0.0
    %178 = vmatprep.mubr.f32.mxu0 0.0
    %179 = vmatmul.mubr.f32.gmra.mrb[0].mxu0 %v103
    %v180 = vpop.f32.mrb[0].mxu0
    %v181 = vadd.f32 %v84, %v180
    %v182 = vpop.f32.mrb[0].mxu0
    %v183 = vadd.f32 %v88, %v182
    %184 = vmatprep.mubr.f32.mxu0 0.0
    %185 = vmatmul.mubr.f32.gmra.mrb[0].mxu0 %v106
    %v186 = vpop.f32.mrb[0].mxu0
    %v187 = vadd.f32 %v84, %v186
    %v188 = vpop.f32.mrb[0].mxu0
    %v189 = vadd.f32 %v88, %v188
    %190 = vmatprep.mubr.f32.mxu0 0.0
    %191 = vmatmul.mubr.f32.gmra.mrb[0].mxu0 %v109
    %v192 = vpop.f32.mrb[0].mxu0
    %v193 = vadd.f32 %v84, %v192
    %v194 = vpop.f32.mrb[0].mxu0
    %v195 = vadd.f32 %v88, %v194
    %196 = vmatprep.mubr.f32.mxu0 0.0
    %197 = vmatmul.mubr.f32.gmra.mrb[0].mxu0 %v112
    %v198 = vpop.f32.mrb[0].mxu0
    %v199 = vadd.f32 %v84, %v198
    %v200 = vpop.f32.mrb[0].mxu0
    %v201 = vadd.f32 %v88, %v200
    %202 = vdwg.mxu0
    %203 = vmatprep.subr.mxu0 %v50
    %204 = vmatpush1.msra.mxu0 %v49
    %205 = vmatprep.subr.mxu0 %v54
    %206 = vmatpush1.msra.mxu0 %v53
    %207 = vmatprep.subr.mxu0 %v58
    %208 = vmatpush1.msra.mxu0 %v57
    %209 = vmatprep.subr.mxu0 %v62
    %210 = vmatpush1.msra.mxu0 %v61
    %211 = vmatprep.subr.mxu0 %v66
    %212 = vmatpush1.msra.mxu0 %v65
    %213 = vmatprep.subr.mxu0 %v70
    %214 = vmatpush1.msra.mxu0 %v69
    %215 = vmatprep.subr.mxu0 %v74
    %216 = vmatpush1.msra.mxu0 %v73
    %217 = vmatprep.subr.mxu0 %v78
    %218 = vmatpush1.msra.mxu0 %v77
    %219 = vmatprep.subr.mxu0 0.0
    %220 = vmatpush1.msra.mxu0 0.0
    %221 = vmatprep.subr.mxu0 0.0
    %222 = vmatpush1.msra.mxu0 0.0
    %223 = vmatprep.subr.mxu0 0.0
    %224 = vmatpush1.msra.mxu0 0.0
    %225 = vmatprep.subr.mxu0 0.0
    %226 = vmatpush1.msra.mxu0 0.0
    %227 = vmatprep.subr.mxu0 0.0
    %228 = vmatpush1.msra.mxu0 0.0
    %229 = vmatprep.subr.mxu0 0.0
    %230 = vmatpush1.msra.mxu0 0.0
    %231 = vmatprep.subr.mxu0 0.0
    %232 = vmatpush1.msra.mxu0 0.0
    %233 = vmatprep.subr.mxu0 0.0
    %234 = vmatpush1.msra.mxu0 0.0
    %235 = vmatprep.subr.mxu0 0.0
    %236 = vmatpush1.msra.mxu0 0.0
    %237 = vmatprep.subr.mxu0 0.0
    %238 = vmatpush1.msra.mxu0 0.0
    %239 = vmatprep.subr.mxu0 0.0
    %240 = vmatpush1.msra.mxu0 0.0
    %241 = vmatprep.subr.mxu0 0.0
    %242 = vmatpush1.msra.mxu0 0.0
    %243 = vmatprep.subr.mxu0 0.0
    %244 = vmatpush1.msra.mxu0 0.0
    %245 = vmatprep.subr.mxu0 0.0
    %246 = vmatpush1.msra.mxu0 0.0
    %247 = vmatprep.subr.mxu0 0.0
    %248 = vmatpush1.msra.mxu0 0.0
    %249 = vmatprep.subr.mxu0 0.0
    %250 = vmatpush1.msra.mxu0 0.0
    %251 = vmatprep.subr.mxu0 0.0
    %252 = vmatpush1.msra.mxu0 0.0
    %253 = vmatprep.subr.mxu0 0.0
    %254 = vmatpush1.msra.mxu0 0.0
    %255 = vmatprep.subr.mxu0 0.0
    %256 = vmatpush1.msra.mxu0 0.0
    %257 = vmatprep.subr.mxu0 0.0
    %258 = vmatpush1.msra.mxu0 0.0
    %259 = vmatprep.subr.mxu0 0.0
    %260 = vmatpush1.msra.mxu0 0.0
    %261 = vmatprep.subr.mxu0 0.0
    %262 = vmatpush1.msra.mxu0 0.0
    %263 = vmatprep.subr.mxu0 0.0
    %264 = vmatpush1.msra.mxu0 0.0
    %265 = vmatprep.subr.mxu0 0.0
    %266 = vmatpush1.msra.mxu0 0.0
    %267 = vmatprep.mubr.f32.mxu0 0.0
    %268 = vmatmul.mubr.f32.gmra.mrb[0].mxu0 %v103
    %v269 = vpop.f32.mrb[0].mxu0
    %v270 = vadd.f32 %v92, %v269
    %v271 = vpop.f32.mrb[0].mxu0
    %v272 = vadd.f32 %v96, %v271
    %273 = vmatprep.mubr.f32.mxu0 0.0
    %274 = vmatmul.mubr.f32.gmra.mrb[0].mxu0 %v106
    %v275 = vpop.f32.mrb[0].mxu0
    %v276 = vadd.f32 %v92, %v275
    %v277 = vpop.f32.mrb[0].mxu0
    %v278 = vadd.f32 %v96, %v277
    %279 = vmatprep.mubr.f32.mxu0 0.0
    %280 = vmatmul.mubr.f32.gmra.mrb[0].mxu0 %v109
    %v281 = vpop.f32.mrb[0].mxu0
    %v282 = vadd.f32 %v92, %v281
    %v283 = vpop.f32.mrb[0].mxu0
    %v284 = vadd.f32 %v96, %v283
    %285 = vmatprep.mubr.f32.mxu0 0.0
    %286 = vmatmul.mubr.f32.gmra.mrb[0].mxu0 %v112
    %v287 = vpop.f32.mrb[0].mxu0
    %v288 = vadd.f32 %v92, %v287
    %v289 = vpop.f32.mrb[0].mxu0
    %v290 = vadd.f32 %v96, %v289
    %291 = vdwg.mxu0
    %292 = vst [vmem:[#allocation7] sm:$0xff] %v181
    %293 = vst [vmem:[#allocation7 + $0x8] sm:$0xff] %v183
    %294 = vst [vmem:[#allocation7 + $0x10] sm:$0xff] %v270
    %295 = vst [vmem:[#allocation7 + $0x18] sm:$0xff] %v272
    %296 = vst [vmem:[#allocation7 + $0x20] sm:$0xff] %v187
    %297 = vst [vmem:[#allocation7 + $0x28] sm:$0xff] %v189
    %298 = vst [vmem:[#allocation7 + $0x30] sm:$0xff] %v276
    %299 = vst [vmem:[#allocation7 + $0x38] sm:$0xff] %v278
    %300 = vst [vmem:[#allocation7 + $0x40] sm:$0xff] %v193
    %301 = vst [vmem:[#allocation7 + $0x48] sm:$0xff] %v195
    %302 = vst [vmem:[#allocation7 + $0x50] sm:$0xff] %v282
    %303 = vst [vmem:[#allocation7 + $0x58] sm:$0xff] %v284
    %304 = vst [vmem:[#allocation7 + $0x60] sm:$0xff] %v199
    %305 = vst [vmem:[#allocation7 + $0x68] sm:$0xff] %v201
    %306 = vst [vmem:[#allocation7 + $0x70] sm:$0xff] %v288
    %307 = vst [vmem:[#allocation7 + $0x78] sm:$0xff] %v290
    // Predicated region
    $region22: #{tpu_custom_call.1} parent=1 // pred_check
      _
    $region23: #{tpu_custom_call.1} parent=1 // pred_check_branch
      %309 = sbr.rel (0) target = $region25
    $region24: #{tpu_custom_call.1} parent=1 // pred_region
      %s311 = ssub.s32 2048, 2048
      %312 = vsyncadd [#allocation4], %s311
      %s313 = sshll.u32 [#allocation7], 4
      %s314 = int_to_ptr.vmem [resolvable:$true] %s313
      %319 = dma.vmem_to_hbm [thread:$0]  %s314, 2048, %s3, [#allocation4], 512, 512, 32
    $region25: #{tpu_custom_call.1} parent=1 // pred_fallthru
      _
    // Predicated region
    $region26: #{tpu_custom_call.1} parent=1 // pred_check
      _
    $region27: #{tpu_custom_call.1} parent=1 // pred_check_branch
      %321 = sbr.rel (0) target = $region29
    $region28: #{tpu_custom_call.1} parent=1 // pred_region
      %322 = dma.done [#allocation4], 2048
    $region29: #{tpu_custom_call.1} parent=1 // pred_fallthru
      _
    %323 = vsyncpa [#allocation3], 1
    %324 = vsyncpa [#allocation6], 1
    %325 = vsyncpa [#allocation4], 1

</llo_original>
